<compile_context>
chip_gen: v5e
topology: v5e:2x2
jax: 0.10.0
libtpu: 0.0.40
codegen_flags: <defaults>
</compile_context>

<pallas_src>
import functools
import math

import jax
import jax.numpy as jnp
from jax import lax
from jax.experimental import pallas as pl
from jax.experimental.pallas import tpu as pltpu


def _msa_kernel(x_ref, wq_ref, bq_ref, wkv_ref, bkv_ref, wp_ref, bp_ref,
                o_ref, acc_ref, k_scr, v_scr,
                *, group_size, head_dim, q_tile, weights_resident):
    """One grid step == one (batch, query-tile, head-group).

    x_ref:   (N, C)            full sequence for this batch element
    wq_ref:  (HG|1, C, GK)     scale folded in
    bq_ref:  (HG|1, 1, GK)     scale folded in
    wkv_ref: (HG|1, C, 2*GK)   fused [K | V] weights
    bkv_ref: (HG|1, 1, 2*GK)
    wp_ref:  (HG|1, GK, C)     rows of W_proj.T belonging to this head group
    bp_ref:  (1, C)
    o_ref:   (tq, C)
    acc_ref: VMEM (tq, C) f32  output-projection accumulator (head-group reduction)
    k_scr:   VMEM (HG, N, GK)  per-group K cache (filled at query-tile 0)
    v_scr:   VMEM (HG, N, GK)  per-group V cache
    """
    G, hd, tq = group_size, head_dim, q_tile
    GK = G * hd
    qi = pl.program_id(1)                   # query-tile index
    g = pl.program_id(2)                    # head-group index (reduction axis)
    ng = pl.num_programs(2)
    wi = g if weights_resident else 0       # which weight block row to use
    cdt = x_ref.dtype                       # MXU operand dtype (bf16 if params bf16)

    @pl.when(g == 0)
    def _init():
        acc_ref[...] = jnp.zeros_like(acc_ref)

    # Fused K/V projection for this head group, computed once per batch element
    # (at the first query tile) and cached in VMEM scratch for later tiles.
    @pl.when(qi == 0)
    def _compute_kv():
        kv = jnp.dot(x_ref[...], wkv_ref[wi],
                     preferred_element_type=jnp.float32) + bkv_ref[wi]
        kv = kv.astype(cdt)                 # (N, 2*GK)
        k_scr[g] = kv[:, :GK]
        v_scr[g] = kv[:, GK:]

    k = k_scr[g]                            # (N, GK)
    v = v_scr[g]                            # (N, GK)

    # Q projection for this query tile (scale already folded into w_q / b_q).
    q_start = pl.multiple_of(qi * tq, tq)
    x_q = x_ref[pl.ds(q_start, tq), :]      # (tq, C)
    q = jnp.dot(x_q, wq_ref[wi], preferred_element_type=jnp.float32) + bq_ref[wi]
    q = q.astype(cdt)                       # (tq, GK)

    # Per-head attention inside the group; head outputs are concatenated so the
    # output-projection matmul below contracts GK (full MXU depth), not hd.
    o_heads = []
    for h in range(G):
        sl = slice(h * hd, (h + 1) * hd)
        s = lax.dot_general(q[:, sl], k[:, sl], (((1,), (1,)), ((), ())),
                            preferred_element_type=jnp.float32)      # (tq, N)
        m = jnp.max(s, axis=-1, keepdims=True)
        p = jnp.exp(s - m)
        l = jnp.sum(p, axis=-1, keepdims=True)
        # attn_dropout: identity (eval mode)
        o_h = jnp.dot(p.astype(cdt), v[:, sl],
                      preferred_element_type=jnp.float32)             # (tq, hd)
        o_heads.append((o_h * pl.reciprocal(l, approx=True)).astype(cdt))
    o_grp = jnp.concatenate(o_heads, axis=-1)                         # (tq, GK)

    # Fused output projection: accumulate this head group's contribution.
    acc_ref[...] += jnp.dot(o_grp, wp_ref[wi],
                            preferred_element_type=jnp.float32)       # (tq, C)

    @pl.when(g == ng - 1)
    def _finalize():
        # proj_dropout: identity (eval mode)
        o_ref[...] = (acc_ref[...] + bp_ref[...]).astype(o_ref.dtype)


def prepare_msa_params(w_qkv, b_qkv, w_proj, b_proj, num_heads,
                       group_size=None, dtype=None):
    """One-time layout transform (do NOT call in the hot path).

    Inputs use the PyTorch nn.Linear layout: w_qkv (3C, C), b_qkv (3C,),
    w_proj (C, C), b_proj (C,).  Heads are packed into groups of `group_size`
    (auto-chosen so group_size*head_dim ~ 256, the v6e/v7x MXU width) and the
    attention scale is folded into the Q weights/bias.  For the bf16-fed MXU
    path (recommended on v6e/v7x when full f32 accuracy is not required), pass
    dtype=jnp.bfloat16 and feed bf16 activations.
    """
    three_c, C = w_qkv.shape
    H = num_heads
    assert three_c == 3 * C and C % H == 0
    hd = C // H
    scale = hd ** (-0.5)

    if group_size is None:
        group_size = max(1, min(H, 256 // max(hd, 1)))
        while H % group_size:
            group_size -= 1
    G = group_size
    assert H % G == 0, "group_size must divide num_heads"
    HG = H // G
    GK = G * hd

    w = jnp.asarray(w_qkv, jnp.float32).reshape(3, H, hd, C)
    b = jnp.asarray(b_qkv, jnp.float32).reshape(3, H, hd)

    def group_w(wm):   # (H, hd, C) -> (HG, C, G*hd)
        return jnp.transpose(wm.reshape(HG, G, hd, C), (0, 3, 1, 2)).reshape(HG, C, GK)

    def group_b(bm):   # (H, hd) -> (HG, 1, G*hd)
        return bm.reshape(HG, 1, GK)

    w_q = group_w(w[0]) * scale                                    # (HG, C, GK)
    b_q = group_b(b[0]) * scale                                    # (HG, 1, GK)
    w_kv = jnp.concatenate([group_w(w[1]), group_w(w[2])], -1)     # (HG, C, 2GK)
    b_kv = jnp.concatenate([group_b(b[1]), group_b(b[2])], -1)     # (HG, 1, 2GK)

    # out = y @ W_proj.T == sum_g o_g @ W_proj[:, g*GK:(g+1)*GK].T
    w_p = jnp.transpose(jnp.asarray(w_proj, jnp.float32).reshape(C, HG, GK),
                        (1, 2, 0))                                 # (HG, GK, C)
    b_p = jnp.asarray(b_proj, jnp.float32).reshape(1, C)           # (1, C)

    tensors = dict(w_q=w_q, b_q=b_q, w_kv=w_kv, b_kv=b_kv, w_p=w_p, b_p=b_p)
    if dtype is not None:
        tensors = {k: v.astype(dtype) for k, v in tensors.items()}
    tensors.update(num_heads=H, head_dim=hd, group_size=G)
    return tensors


def _pick_q_tile(n):
    """Largest MXU/lane-friendly query tile that evenly divides n (fallback n)."""
    for t in (512, 256, 128):
        if n % t == 0:
            return t
    return n


def _vmem_capacity_bytes():
    try:
        return int(pltpu.get_tpu_info().vmem_capacity_bytes)
    except Exception:          # older jax / abstract backend — assume v7x (smallest)
        return 64 * 1024 * 1024


def multi_head_self_attention(x, params, *, q_tile=None, weights_resident=None,
                              vmem_limit_bytes=None):
    """x: (B, N, C). params: output of prepare_msa_params().

    For best performance on real deployments keep C a multiple of 128 and N a
    multiple of 8 (lane/sublane-dense blocks); the kernel is still correct for
    other shapes as long as the chosen q_tile divides N.
    """
    B, N, C = x.shape
    H, G, hd = params["num_heads"], params["group_size"], params["head_dim"]
    HG = H // G
    GK = G * hd
    assert C == H * hd, "x channel dim inconsistent with params"
    w_q, b_q = params["w_q"], params["b_q"]
    w_kv, b_kv = params["w_kv"], params["b_kv"]
    w_p, b_p = params["w_p"], params["b_p"]
    assert x.dtype == w_q.dtype, (
        "activation dtype must match param dtype "
        "(cast x or pass dtype= to prepare_msa_params)")

    tq = _pick_q_tile(N) if q_tile is None else q_tile
    assert N % tq == 0 and (tq == N or tq % 8 == 0), "bad q_tile"
    n_q_tiles = N // tq

    weight_bytes = sum(int(a.size) * a.dtype.itemsize
                       for a in (w_q, b_q, w_kv, b_kv, w_p, b_p))
    vmem_cap = _vmem_capacity_bytes()
    if weights_resident is None:
        # Keep all weights resident in VMEM (fetched once, no per-step weight
        # DMA) when they take at most ~1/3 of VMEM after double-buffering.
        weights_resident = 2 * weight_bytes <= vmem_cap // 3

    if weights_resident:
        w_rows, w_map = HG, (lambda b, qi, g: (0, 0, 0))
    else:
        w_rows, w_map = 1, (lambda b, qi, g: (g, 0, 0))

    in_specs = [
        pl.BlockSpec((None, N, C), lambda b, qi, g: (b, 0, 0)),       # x (full seq)
        pl.BlockSpec((w_rows, C, GK), w_map),                         # w_q
        pl.BlockSpec((w_rows, 1, GK), w_map),                         # b_q
        pl.BlockSpec((w_rows, C, 2 * GK), w_map),                     # w_kv
        pl.BlockSpec((w_rows, 1, 2 * GK), w_map),                     # b_kv
        pl.BlockSpec((w_rows, GK, C), w_map),                         # w_p
        pl.BlockSpec((1, C), lambda b, qi, g: (0, 0)),                # b_p
    ]
    out_spec = pl.BlockSpec((None, tq, C), lambda b, qi, g: (b, qi, 0))

    if vmem_limit_bytes is None:
        isz = x.dtype.itemsize
        est = (2 * N * C * isz                     # x block (double-buffered)
               + 2 * tq * C * isz                  # output block
               + tq * C * 4                        # f32 projection accumulator
               + 2 * HG * N * GK * isz             # K/V caches
               + 2 * (weight_bytes if weights_resident else weight_bytes // HG)
               + 6 * tq * N * 4                    # score/softmax intermediates
               + 2 * N * 2 * GK * 4                # fused K/V projection temp
               + (4 << 20))                        # slack
        vmem_limit_bytes = int(min(vmem_cap, max(est, 32 << 20)))

    kernel = functools.partial(
        _msa_kernel, group_size=G, head_dim=hd, q_tile=tq,
        weights_resident=weights_resident)

    return pl.pallas_call(
        kernel,
        out_shape=jax.ShapeDtypeStruct((B, N, C), x.dtype),
        grid_spec=pltpu.PrefetchScalarGridSpec(
            num_scalar_prefetch=0,
            grid=(B, n_q_tiles, HG),
            in_specs=in_specs,
            out_specs=out_spec,
            scratch_shapes=[
                pltpu.VMEM((tq, C), jnp.float32),   # output-projection accumulator
                pltpu.VMEM((HG, N, GK), x.dtype),   # K cache
                pltpu.VMEM((HG, N, GK), x.dtype),   # V cache
            ],
        ),
        # Query-tile axis stays "arbitrary": the K/V cache is filled at tile 0,
        # so one batch element's tiles cannot be split across TensorCores.
        compiler_params=pltpu.CompilerParams(
            dimension_semantics=("parallel", "arbitrary", "arbitrary"),
            vmem_limit_bytes=vmem_limit_bytes),
    )(x, w_q, b_q, w_kv, b_kv, w_p, b_p)


def _reference_msa(x, w_qkv, b_qkv, w_proj, b_proj, num_heads):
    """Pure-JAX reference mirroring the PyTorch forward (eval mode)."""
    B, N, C = x.shape
    hd = C // num_heads
    scale = hd ** (-0.5)
    qkv = x @ w_qkv.T + b_qkv                                    # (B, N, 3C)
    qkv = qkv.reshape(B, N, 3, num_heads, hd).transpose(2, 0, 3, 1, 4)
    q, k, v = qkv[0], qkv[1], qkv[2]                             # (B, H, N, hd)
    attn = jnp.einsum("bhnd,bhmd->bhnm", q, k) * scale
    attn = jax.nn.softmax(attn, axis=-1)
    out = jnp.einsum("bhnm,bhmd->bhnd", attn, v)
    out = out.transpose(0, 2, 1, 3).reshape(B, N, C)
    return out @ w_proj.T + b_proj


if __name__ == "__main__":
    def run_case(B, N, C, H, *, group_size=None, q_tile=None,
                 weights_resident=None, dtype=None, atol=2e-3, rtol=2e-3):
        key = jax.random.PRNGKey(0)
        kx, kw, kb, kp, kq = jax.random.split(key, 5)
        x = jax.random.normal(kx, (B, N, C), jnp.float32)
        bound = 1.0 / math.sqrt(C)
        w_qkv = jax.random.uniform(kw, (3 * C, C), jnp.float32, -bound, bound)
        b_qkv = jax.random.uniform(kb, (3 * C,), jnp.float32, -bound, bound)
        w_proj = jax.random.uniform(kp, (C, C), jnp.float32, -bound, bound)
        b_proj = jax.random.uniform(kq, (C,), jnp.float32, -bound, bound)

        ref = _reference_msa(x, w_qkv, b_qkv, w_proj, b_proj, H)
        params = prepare_msa_params(w_qkv, b_qkv, w_proj, b_proj, H,
                                    group_size=group_size, dtype=dtype)
        xk = x if dtype is None else x.astype(dtype)
        out = multi_head_self_attention(xk, params, q_tile=q_tile,
                                        weights_resident=weights_resident)
        out = jax.block_until_ready(out)
        assert out.shape == (B, N, C)
        assert jnp.allclose(out.astype(jnp.float32), ref, atol=atol, rtol=rtol), \
            f"mismatch (B={B}, N={N}, C={C}, H={H}, dtype={dtype})"

    # 1) Default config: all heads fused into one group (G=H), one query tile, f32.
    run_case(2, 8, 32, 4)
    # 2) Exercise query tiling (2 tiles), 2 head groups and streamed weights, f32.
    run_case(1, 16, 32, 4, group_size=2, q_tile=8, weights_resident=False)
    # 3) bf16 MXU-fed path (recommended for f32 callers on v6e/v7x).
    run_case(2, 8, 32, 4, dtype=jnp.bfloat16, atol=1e-1, rtol=1e-1)

    print("KERNEL_OK")
</pallas_src>

<mosaic_0001>
module attributes {stable_mosaic.version = 11 : i64} {
  func.func @_msa_kernel(%arg0: i32, %arg1: i32, %arg2: i32, %arg3: memref<1x8x32xf32, #tpu.memory_space<vmem>>, %arg4: memref<1x32x32xf32, #tpu.memory_space<vmem>>, %arg5: memref<1x1x32xf32, #tpu.memory_space<vmem>>, %arg6: memref<1x32x64xf32, #tpu.memory_space<vmem>>, %arg7: memref<1x1x64xf32, #tpu.memory_space<vmem>>, %arg8: memref<1x32x32xf32, #tpu.memory_space<vmem>>, %arg9: memref<1x32xf32, #tpu.memory_space<vmem>>, %arg10: memref<1x8x32xf32, #tpu.memory_space<vmem>>, %arg11: memref<8x32xf32, #tpu.memory_space<vmem>>, %arg12: memref<1x8x32xf32, #tpu.memory_space<vmem>>, %arg13: memref<1x8x32xf32, #tpu.memory_space<vmem>>) attributes {dimension_semantics = [#tpu.dimension_semantics<parallel>, #tpu.dimension_semantics<arbitrary>, #tpu.dimension_semantics<arbitrary>], iteration_bounds = array<i64: 2, 1, 1>, scalar_prefetch = 0 : i64, scratch_operands = 3 : i64, tpu.core_type = #tpu.core_type<tc>, window_params = [{transform_indices = @transform_0, window_bounds = array<i64: 1, 8, 32>}, {pipeline_mode = #tpu.pipeline_mode<synchronous>, transform_indices = @transform_1, window_bounds = array<i64: 1, 32, 32>}, {pipeline_mode = #tpu.pipeline_mode<synchronous>, transform_indices = @transform_2, window_bounds = array<i64: 1, 1, 32>}, {pipeline_mode = #tpu.pipeline_mode<synchronous>, transform_indices = @transform_3, window_bounds = array<i64: 1, 32, 64>}, {pipeline_mode = #tpu.pipeline_mode<synchronous>, transform_indices = @transform_4, window_bounds = array<i64: 1, 1, 64>}, {pipeline_mode = #tpu.pipeline_mode<synchronous>, transform_indices = @transform_5, window_bounds = array<i64: 1, 32, 32>}, {pipeline_mode = #tpu.pipeline_mode<synchronous>, transform_indices = @transform_6, window_bounds = array<i64: 1, 32>}, {transform_indices = @transform_7, window_bounds = array<i64: 1, 8, 32>}]} {
    %c0_i32 = arith.constant 0 : i32
    %0 = arith.cmpi eq, %arg2, %c0_i32 : i32
    %1 = arith.extui %0 : i1 to i32
    %c0_i32_0 = arith.constant 0 : i32
    %2 = arith.cmpi ne, %1, %c0_i32_0 : i32
    scf.if %2 {
      %cst_37 = arith.constant 0.000000e+00 : f32
      %97 = vector.broadcast %cst_37 : f32 to vector<8x32xf32>
      %c0_38 = arith.constant 0 : index
      %c0_39 = arith.constant 0 : index
      %98 = vector.load %arg11[%c0_38, %c0_39] : memref<8x32xf32, #tpu.memory_space<vmem>>, vector<8x32xf32>
      tpu.vector_store %arg11[%c0_38, %c0_39], %97 {strides = array<i32>} : memref<8x32xf32, #tpu.memory_space<vmem>>, vector<8x32xf32>,
    } else {
    }
    %c0_i32_1 = arith.constant 0 : i32
    %3 = arith.cmpi eq, %arg1, %c0_i32_1 : i32
    %4 = arith.extui %3 : i1 to i32
    %c0_i32_2 = arith.constant 0 : i32
    %5 = arith.cmpi ne, %4, %c0_i32_2 : i32
    scf.if %5 {
      %c0_37 = arith.constant 0 : index
      %c0_38 = arith.constant 0 : index
      %c0_39 = arith.constant 0 : index
      %97 = vector.load %arg3[%c0_37, %c0_38, %c0_39] : memref<1x8x32xf32, #tpu.memory_space<vmem>>, vector<1x8x32xf32>
      %98 = vector.shape_cast %97 : vector<1x8x32xf32> to vector<8x32xf32>
      %99 = arith.index_cast %arg2 : i32 to index
      %c0_40 = arith.constant 0 : index
      %c0_41 = arith.constant 0 : index
      %100 = vector.load %arg6[%99, %c0_40, %c0_41] : memref<1x32x64xf32, #tpu.memory_space<vmem>>, vector<1x32x64xf32>
      %101 = vector.shape_cast %100 : vector<1x32x64xf32> to vector<32x64xf32>
      %cst_42 = arith.constant dense<0.000000e+00> : vector<8x64xf32>
      %102 = tpu.matmul %98, %101, %cst_42 {dimension_numbers = #tpu.dot_dimension_numbers<[1], [0], [0], [1], [0, 0, 1, 1], [], []>} : vector<8x32xf32>, vector<32x64xf32>, vector<8x64xf32> -> vector<8x64xf32>
      %103 = arith.index_cast %arg2 : i32 to index
      %c0_43 = arith.constant 0 : index
      %c0_44 = arith.constant 0 : index
      %104 = vector.load %arg7[%103, %c0_43, %c0_44] : memref<1x1x64xf32, #tpu.memory_space<vmem>>, vector<1x1x64xf32>
      %105 = vector.shape_cast %104 : vector<1x1x64xf32> to vector<1x64xf32>
      %106 = vector.broadcast %105 : vector<1x64xf32> to vector<8x64xf32>
      %107 = arith.addf %102, %106 : vector<8x64xf32>
      %108 = vector.extract_strided_slice %107 {offsets = [0, 0], sizes = [8, 32], strides = [1, 1]} : vector<8x64xf32> to vector<8x32xf32>
      %109 = arith.index_cast %arg2 : i32 to index
      %c0_45 = arith.constant 0 : index
      %c0_46 = arith.constant 0 : index
      %110 = vector.load %arg12[%109, %c0_45, %c0_46] : memref<1x8x32xf32, #tpu.memory_space<vmem>>, vector<1x8x32xf32>
      %111 = vector.shape_cast %110 : vector<1x8x32xf32> to vector<8x32xf32>
      %112 = vector.shape_cast %108 : vector<8x32xf32> to vector<1x8x32xf32>
      tpu.vector_store %arg12[%109, %c0_45, %c0_46], %112 {strides = array<i32>} : memref<1x8x32xf32, #tpu.memory_space<vmem>>, vector<1x8x32xf32>,
      %113 = vector.extract_strided_slice %107 {offsets = [0, 32], sizes = [8, 32], strides = [1, 1]} : vector<8x64xf32> to vector<8x32xf32>
      %114 = arith.index_cast %arg2 : i32 to index
      %c0_47 = arith.constant 0 : index
      %c0_48 = arith.constant 0 : index
      %115 = vector.load %arg13[%114, %c0_47, %c0_48] : memref<1x8x32xf32, #tpu.memory_space<vmem>>, vector<1x8x32xf32>
      %116 = vector.shape_cast %115 : vector<1x8x32xf32> to vector<8x32xf32>
      %117 = vector.shape_cast %113 : vector<8x32xf32> to vector<1x8x32xf32>
      tpu.vector_store %arg13[%114, %c0_47, %c0_48], %117 {strides = array<i32>} : memref<1x8x32xf32, #tpu.memory_space<vmem>>, vector<1x8x32xf32>,
    } else {
    }
    %6 = arith.index_cast %arg2 : i32 to index
    %c0 = arith.constant 0 : index
    %c0_3 = arith.constant 0 : index
    %7 = vector.load %arg12[%6, %c0, %c0_3] : memref<1x8x32xf32, #tpu.memory_space<vmem>>, vector<1x8x32xf32>
    %8 = vector.shape_cast %7 : vector<1x8x32xf32> to vector<8x32xf32>
    %9 = arith.index_cast %arg2 : i32 to index
    %c0_4 = arith.constant 0 : index
    %c0_5 = arith.constant 0 : index
    %10 = vector.load %arg13[%9, %c0_4, %c0_5] : memref<1x8x32xf32, #tpu.memory_space<vmem>>, vector<1x8x32xf32>
    %11 = vector.shape_cast %10 : vector<1x8x32xf32> to vector<8x32xf32>
    %c8_i32 = arith.constant 8 : i32
    %12 = arith.muli %arg1, %c8_i32 : i32
    %13 = tpu.assume_multiple %12, 8 : i32
    %c0_6 = arith.constant 0 : index
    %14 = arith.index_cast %13 : i32 to index
    %c0_7 = arith.constant 0 : index
    %15 = vector.load %arg3[%c0_6, %14, %c0_7] : memref<1x8x32xf32, #tpu.memory_space<vmem>>, vector<1x8x32xf32>
    %16 = vector.shape_cast %15 : vector<1x8x32xf32> to vector<8x32xf32>
    %17 = arith.index_cast %arg2 : i32 to index
    %c0_8 = arith.constant 0 : index
    %c0_9 = arith.constant 0 : index
    %18 = vector.load %arg4[%17, %c0_8, %c0_9] : memref<1x32x32xf32, #tpu.memory_space<vmem>>, vector<1x32x32xf32>
    %19 = vector.shape_cast %18 : vector<1x32x32xf32> to vector<32x32xf32>
    %cst = arith.constant dense<0.000000e+00> : vector<8x32xf32>
    %20 = tpu.matmul %16, %19, %cst {dimension_numbers = #tpu.dot_dimension_numbers<[1], [0], [0], [1], [0, 0, 1, 1], [], []>} : vector<8x32xf32>, vector<32x32xf32>, vector<8x32xf32> -> vector<8x32xf32>
    %21 = arith.index_cast %arg2 : i32 to index
    %c0_10 = arith.constant 0 : index
    %c0_11 = arith.constant 0 : index
    %22 = vector.load %arg5[%21, %c0_10, %c0_11] : memref<1x1x32xf32, #tpu.memory_space<vmem>>, vector<1x1x32xf32>
    %23 = vector.shape_cast %22 : vector<1x1x32xf32> to vector<1x32xf32>
    %24 = vector.broadcast %23 : vector<1x32xf32> to vector<8x32xf32>
    %25 = arith.addf %20, %24 : vector<8x32xf32>
    %26 = vector.extract_strided_slice %25 {offsets = [0, 0], sizes = [8, 8], strides = [1, 1]} : vector<8x32xf32> to vector<8x8xf32>
    %27 = vector.extract_strided_slice %8 {offsets = [0, 0], sizes = [8, 8], strides = [1, 1]} : vector<8x32xf32> to vector<8x8xf32>
    %cst_12 = arith.constant dense<0.000000e+00> : vector<8x8xf32>
    %28 = tpu.matmul %26, %27, %cst_12 {dimension_numbers = #tpu.dot_dimension_numbers<[1], [1], [0], [0], [0, 0, 1, 0], [], []>} : vector<8x8xf32>, vector<8x8xf32>, vector<8x8xf32> -> vector<8x8xf32>
    %cst_13 = arith.constant dense<0xFF800000> : vector<8xf32>
    %29 = vector.multi_reduction <maximumf>, %28, %cst_13 [1] : vector<8x8xf32> to vector<8xf32>
    %30 = vector.shape_cast %29 : vector<8xf32> to vector<8x1xf32>
    %31 = vector.broadcast %30 : vector<8x1xf32> to vector<8x8xf32>
    %32 = arith.subf %28, %31 : vector<8x8xf32>
    %33 = math.exp %32 : vector<8x8xf32>
    %cst_14 = arith.constant dense<0.000000e+00> : vector<8xf32>
    %34 = vector.multi_reduction <add>, %33, %cst_14 [1] : vector<8x8xf32> to vector<8xf32>
    %35 = vector.shape_cast %34 : vector<8xf32> to vector<8x1xf32>
    %36 = vector.extract_strided_slice %11 {offsets = [0, 0], sizes = [8, 8], strides = [1, 1]} : vector<8x32xf32> to vector<8x8xf32>
    %cst_15 = arith.constant dense<0.000000e+00> : vector<8x8xf32>
    %37 = tpu.matmul %33, %36, %cst_15 {dimension_numbers = #tpu.dot_dimension_numbers<[1], [0], [0], [1], [0, 0, 1, 1], [], []>} : vector<8x8xf32>, vector<8x8xf32>, vector<8x8xf32> -> vector<8x8xf32>
    %38 = tpu.reciprocal %35 {approx = true} : vector<8x1xf32> -> vector<8x1xf32>
    %39 = vector.broadcast %38 : vector<8x1xf32> to vector<8x8xf32>
    %40 = arith.mulf %37, %39 : vector<8x8xf32>
    %41 = vector.extract_strided_slice %25 {offsets = [0, 8], sizes = [8, 8], strides = [1, 1]} : vector<8x32xf32> to vector<8x8xf32>
    %42 = vector.extract_strided_slice %8 {offsets = [0, 8], sizes = [8, 8], strides = [1, 1]} : vector<8x32xf32> to vector<8x8xf32>
    %cst_16 = arith.constant dense<0.000000e+00> : vector<8x8xf32>
    %43 = tpu.matmul %41, %42, %cst_16 {dimension_numbers = #tpu.dot_dimension_numbers<[1], [1], [0], [0], [0, 0, 1, 0], [], []>} : vector<8x8xf32>, vector<8x8xf32>, vector<8x8xf32> -> vector<8x8xf32>
    %cst_17 = arith.constant dense<0xFF800000> : vector<8xf32>
    %44 = vector.multi_reduction <maximumf>, %43, %cst_17 [1] : vector<8x8xf32> to vector<8xf32>
    %45 = vector.shape_cast %44 : vector<8xf32> to vector<8x1xf32>
    %46 = vector.broadcast %45 : vector<8x1xf32> to vector<8x8xf32>
    %47 = arith.subf %43, %46 : vector<8x8xf32>
    %48 = math.exp %47 : vector<8x8xf32>
    %cst_18 = arith.constant dense<0.000000e+00> : vector<8xf32>
    %49 = vector.multi_reduction <add>, %48, %cst_18 [1] : vector<8x8xf32> to vector<8xf32>
    %50 = vector.shape_cast %49 : vector<8xf32> to vector<8x1xf32>
    %51 = vector.extract_strided_slice %11 {offsets = [0, 8], sizes = [8, 8], strides = [1, 1]} : vector<8x32xf32> to vector<8x8xf32>
    %cst_19 = arith.constant dense<0.000000e+00> : vector<8x8xf32>
    %52 = tpu.matmul %48, %51, %cst_19 {dimension_numbers = #tpu.dot_dimension_numbers<[1], [0], [0], [1], [0, 0, 1, 1], [], []>} : vector<8x8xf32>, vector<8x8xf32>, vector<8x8xf32> -> vector<8x8xf32>
    %53 = tpu.reciprocal %50 {approx = true} : vector<8x1xf32> -> vector<8x1xf32>
    %54 = vector.broadcast %53 : vector<8x1xf32> to vector<8x8xf32>
    %55 = arith.mulf %52, %54 : vector<8x8xf32>
    %56 = vector.extract_strided_slice %25 {offsets = [0, 16], sizes = [8, 8], strides = [1, 1]} : vector<8x32xf32> to vector<8x8xf32>
    %57 = vector.extract_strided_slice %8 {offsets = [0, 16], sizes = [8, 8], strides = [1, 1]} : vector<8x32xf32> to vector<8x8xf32>
    %cst_20 = arith.constant dense<0.000000e+00> : vector<8x8xf32>
    %58 = tpu.matmul %56, %57, %cst_20 {dimension_numbers = #tpu.dot_dimension_numbers<[1], [1], [0], [0], [0, 0, 1, 0], [], []>} : vector<8x8xf32>, vector<8x8xf32>, vector<8x8xf32> -> vector<8x8xf32>
    %cst_21 = arith.constant dense<0xFF800000> : vector<8xf32>
    %59 = vector.multi_reduction <maximumf>, %58, %cst_21 [1] : vector<8x8xf32> to vector<8xf32>
    %60 = vector.shape_cast %59 : vector<8xf32> to vector<8x1xf32>
    %61 = vector.broadcast %60 : vector<8x1xf32> to vector<8x8xf32>
    %62 = arith.subf %58, %61 : vector<8x8xf32>
    %63 = math.exp %62 : vector<8x8xf32>
    %cst_22 = arith.constant dense<0.000000e+00> : vector<8xf32>
    %64 = vector.multi_reduction <add>, %63, %cst_22 [1] : vector<8x8xf32> to vector<8xf32>
    %65 = vector.shape_cast %64 : vector<8xf32> to vector<8x1xf32>
    %66 = vector.extract_strided_slice %11 {offsets = [0, 16], sizes = [8, 8], strides = [1, 1]} : vector<8x32xf32> to vector<8x8xf32>
    %cst_23 = arith.constant dense<0.000000e+00> : vector<8x8xf32>
    %67 = tpu.matmul %63, %66, %cst_23 {dimension_numbers = #tpu.dot_dimension_numbers<[1], [0], [0], [1], [0, 0, 1, 1], [], []>} : vector<8x8xf32>, vector<8x8xf32>, vector<8x8xf32> -> vector<8x8xf32>
    %68 = tpu.reciprocal %65 {approx = true} : vector<8x1xf32> -> vector<8x1xf32>
    %69 = vector.broadcast %68 : vector<8x1xf32> to vector<8x8xf32>
    %70 = arith.mulf %67, %69 : vector<8x8xf32>
    %71 = vector.extract_strided_slice %25 {offsets = [0, 24], sizes = [8, 8], strides = [1, 1]} : vector<8x32xf32> to vector<8x8xf32>
    %72 = vector.extract_strided_slice %8 {offsets = [0, 24], sizes = [8, 8], strides = [1, 1]} : vector<8x32xf32> to vector<8x8xf32>
    %cst_24 = arith.constant dense<0.000000e+00> : vector<8x8xf32>
    %73 = tpu.matmul %71, %72, %cst_24 {dimension_numbers = #tpu.dot_dimension_numbers<[1], [1], [0], [0], [0, 0, 1, 0], [], []>} : vector<8x8xf32>, vector<8x8xf32>, vector<8x8xf32> -> vector<8x8xf32>
    %cst_25 = arith.constant dense<0xFF800000> : vector<8xf32>
    %74 = vector.multi_reduction <maximumf>, %73, %cst_25 [1] : vector<8x8xf32> to vector<8xf32>
    %75 = vector.shape_cast %74 : vector<8xf32> to vector<8x1xf32>
    %76 = vector.broadcast %75 : vector<8x1xf32> to vector<8x8xf32>
    %77 = arith.subf %73, %76 : vector<8x8xf32>
    %78 = math.exp %77 : vector<8x8xf32>
    %cst_26 = arith.constant dense<0.000000e+00> : vector<8xf32>
    %79 = vector.multi_reduction <add>, %78, %cst_26 [1] : vector<8x8xf32> to vector<8xf32>
    %80 = vector.shape_cast %79 : vector<8xf32> to vector<8x1xf32>
    %81 = vector.extract_strided_slice %11 {offsets = [0, 24], sizes = [8, 8], strides = [1, 1]} : vector<8x32xf32> to vector<8x8xf32>
    %cst_27 = arith.constant dense<0.000000e+00> : vector<8x8xf32>
    %82 = tpu.matmul %78, %81, %cst_27 {dimension_numbers = #tpu.dot_dimension_numbers<[1], [0], [0], [1], [0, 0, 1, 1], [], []>} : vector<8x8xf32>, vector<8x8xf32>, vector<8x8xf32> -> vector<8x8xf32>
    %83 = tpu.reciprocal %80 {approx = true} : vector<8x1xf32> -> vector<8x1xf32>
    %84 = vector.broadcast %83 : vector<8x1xf32> to vector<8x8xf32>
    %85 = arith.mulf %82, %84 : vector<8x8xf32>
    %86 = tpu.concatenate %40, %55, %70, %85 in 1 : vector<8x8xf32>, vector<8x8xf32>, vector<8x8xf32>, vector<8x8xf32> -> vector<8x32xf32>
    %c0_28 = arith.constant 0 : index
    %c0_29 = arith.constant 0 : index
    %87 = vector.load %arg11[%c0_28, %c0_29] : memref<8x32xf32, #tpu.memory_space<vmem>>, vector<8x32xf32>
    %88 = arith.index_cast %arg2 : i32 to index
    %c0_30 = arith.constant 0 : index
    %c0_31 = arith.constant 0 : index
    %89 = vector.load %arg8[%88, %c0_30, %c0_31] : memref<1x32x32xf32, #tpu.memory_space<vmem>>, vector<1x32x32xf32>
    %90 = vector.shape_cast %89 : vector<1x32x32xf32> to vector<32x32xf32>
    %cst_32 = arith.constant dense<0.000000e+00> : vector<8x32xf32>
    %91 = tpu.matmul %86, %90, %cst_32 {dimension_numbers = #tpu.dot_dimension_numbers<[1], [0], [0], [1], [0, 0, 1, 1], [], []>} : vector<8x32xf32>, vector<32x32xf32>, vector<8x32xf32> -> vector<8x32xf32>
    %92 = arith.addf %87, %91 : vector<8x32xf32>
    %c0_33 = arith.constant 0 : index
    %c0_34 = arith.constant 0 : index
    %93 = vector.load %arg11[%c0_33, %c0_34] : memref<8x32xf32, #tpu.memory_space<vmem>>, vector<8x32xf32>
    tpu.vector_store %arg11[%c0_33, %c0_34], %92 {strides = array<i32>} : memref<8x32xf32, #tpu.memory_space<vmem>>, vector<8x32xf32>,
    %c0_i32_35 = arith.constant 0 : i32
    %94 = arith.cmpi eq, %arg2, %c0_i32_35 : i32
    %95 = arith.extui %94 : i1 to i32
    %c0_i32_36 = arith.constant 0 : i32
    %96 = arith.cmpi ne, %95, %c0_i32_36 : i32
    scf.if %96 {
      %c0_37 = arith.constant 0 : index
      %c0_38 = arith.constant 0 : index
      %97 = vector.load %arg11[%c0_37, %c0_38] : memref<8x32xf32, #tpu.memory_space<vmem>>, vector<8x32xf32>
      %c0_39 = arith.constant 0 : index
      %c0_40 = arith.constant 0 : index
      %98 = vector.load %arg9[%c0_39, %c0_40] : memref<1x32xf32, #tpu.memory_space<vmem>>, vector<1x32xf32>
      %99 = vector.broadcast %98 : vector<1x32xf32> to vector<8x32xf32>
      %100 = arith.addf %97, %99 : vector<8x32xf32>
      %c0_41 = arith.constant 0 : index
      %c0_42 = arith.constant 0 : index
      %c0_43 = arith.constant 0 : index
      %101 = vector.load %arg10[%c0_41, %c0_42, %c0_43] : memref<1x8x32xf32, #tpu.memory_space<vmem>>, vector<1x8x32xf32>
      %102 = vector.shape_cast %101 : vector<1x8x32xf32> to vector<8x32xf32>
      %103 = vector.shape_cast %100 : vector<8x32xf32> to vector<1x8x32xf32>
      tpu.vector_store %arg10[%c0_41, %c0_42, %c0_43], %103 {strides = array<i32>} : memref<1x8x32xf32, #tpu.memory_space<vmem>>, vector<1x8x32xf32>,
    } else {
    }
    return
  }
  func.func @transform_0(%arg0: i32, %arg1: i32, %arg2: i32) -> (i32, i32, i32) {
    %c0_i32 = arith.constant 0 : i32
    %c0_i32_0 = arith.constant 0 : i32
    %c0_i32_1 = arith.constant 0 : i32
    return %arg0, %c0_i32, %c0_i32_0 : i32, i32, i32
  }
  func.func @transform_1(%arg0: i32, %arg1: i32, %arg2: i32) -> (i32, i32, i32) {
    %c0_i32 = arith.constant 0 : i32
    %c0_i32_0 = arith.constant 0 : i32
    %c0_i32_1 = arith.constant 0 : i32
    %c0_i32_2 = arith.constant 0 : i32
    return %c0_i32, %c0_i32_0, %c0_i32_1 : i32, i32, i32
  }
  func.func @transform_2(%arg0: i32, %arg1: i32, %arg2: i32) -> (i32, i32, i32) {
    %c0_i32 = arith.constant 0 : i32
    %c0_i32_0 = arith.constant 0 : i32
    %c0_i32_1 = arith.constant 0 : i32
    %c0_i32_2 = arith.constant 0 : i32
    return %c0_i32, %c0_i32_0, %c0_i32_1 : i32, i32, i32
  }
  func.func @transform_3(%arg0: i32, %arg1: i32, %arg2: i32) -> (i32, i32, i32) {
    %c0_i32 = arith.constant 0 : i32
    %c0_i32_0 = arith.constant 0 : i32
    %c0_i32_1 = arith.constant 0 : i32
    %c0_i32_2 = arith.constant 0 : i32
    return %c0_i32, %c0_i32_0, %c0_i32_1 : i32, i32, i32
  }
  func.func @transform_4(%arg0: i32, %arg1: i32, %arg2: i32) -> (i32, i32, i32) {
    %c0_i32 = arith.constant 0 : i32
    %c0_i32_0 = arith.constant 0 : i32
    %c0_i32_1 = arith.constant 0 : i32
    %c0_i32_2 = arith.constant 0 : i32
    return %c0_i32, %c0_i32_0, %c0_i32_1 : i32, i32, i32
  }
  func.func @transform_5(%arg0: i32, %arg1: i32, %arg2: i32) -> (i32, i32, i32) {
    %c0_i32 = arith.constant 0 : i32
    %c0_i32_0 = arith.constant 0 : i32
    %c0_i32_1 = arith.constant 0 : i32
    %c0_i32_2 = arith.constant 0 : i32
    return %c0_i32, %c0_i32_0, %c0_i32_1 : i32, i32, i32
  }
  func.func @transform_6(%arg0: i32, %arg1: i32, %arg2: i32) -> (i32, i32) {
    %c0_i32 = arith.constant 0 : i32
    %c0_i32_0 = arith.constant 0 : i32
    %c0_i32_1 = arith.constant 0 : i32
    return %c0_i32, %c0_i32_0 : i32, i32
  }
  func.func @transform_7(%arg0: i32, %arg1: i32, %arg2: i32) -> (i32, i32, i32) {
    %c0_i32 = arith.constant 0 : i32
    %c0_i32_0 = arith.constant 0 : i32
    return %arg0, %arg1, %c0_i32 : i32, i32, i32
  }
}

</mosaic_0001>

<llo_original>
// kernel: tpu_custom_call.1
$region0: #{tpu_custom_call.1}
  #allocation0 [shape = 'u32[]', space=smem, size = 0x4, offset = 0x4, fixed_abs, tag = 'smem constant byte address 0x4 - core index']
  #allocation1 [shape = 'u32[72,128]{1,0:T(1,128)}', space=vmem, size = 0x9000, scoped, tag = 'internal scratch']
  #allocation2 [shape = 'f32[8,32]{1,0:T(8,128)}', space=vmem, size = 0x1000, scoped, tag = 'scratch operand']
  #allocation3 [shape = 'f32[1,8,32]{2,1,0:T(8,128)}', space=vmem, size = 0x1000, scoped, tag = 'scratch operand']
  #allocation4 [shape = 'f32[1,8,32]{2,1,0:T(8,128)}', space=vmem, size = 0x1000, scoped, tag = 'scratch operand']
  %s0 = inlined_call_operand.hbm [shape: f32[2,8,32], index: 0, kind: input, shape index: {}]
  %s1 = inlined_call_operand.hbm [shape: f32[1,32,32], index: 1, kind: input, shape index: {}]
  %s2 = inlined_call_operand.vmem [shape: f32[1,1,32], index: 2, kind: input, shape index: {}]
  %s3 = inlined_call_operand.hbm [shape: f32[1,32,64], index: 3, kind: input, shape index: {}]
  %s4 = inlined_call_operand.vmem [shape: f32[1,1,64], index: 4, kind: input, shape index: {}]
  %s5 = inlined_call_operand.hbm [shape: f32[1,32,32], index: 5, kind: input, shape index: {}]
  %s6 = inlined_call_operand.vmem [shape: f32[1,32], index: 6, kind: input, shape index: {}]
  %s7 = inlined_call_operand.hbm [shape: f32[2,8,32], index: 7, kind: output, shape index: {}]
  %s8 = sld [smem:[#allocation0]]
  $region89: #{tpu_custom_call.1} parent=0
    _
  %s10 = ssub.s32 1, %s8
  %s11 = scalar_select 0, %s10, %s8
  $region1: #{tpu_custom_call.1} parent=0
    #allocation5 [shape = 'u8[8192]{0}', space=vmem, size = 0x2000, scoped, tag = 'input window, operand 0']
    #allocation6 [shape = 's32[2]{0}', space=sflag, size = 0x8, scoped, tag = 'scoped memory for tpu_custom_call.1']
    #allocation7 [shape = 's32[2]{0}', space=sflag, size = 0x8, scoped, tag = 'scoped memory for tpu_custom_call.1']
    #allocation8 [shape = 'u8[16384]{0}', space=vmem, size = 0x4000, scoped, tag = 'input window, operand 1, single buffered']
    #allocation9 [shape = 's32[1]{0}', space=sflag, size = 0x4, scoped, tag = 'scoped memory for tpu_custom_call.1']
    #allocation10 [shape = 'u8[16384]{0}', space=vmem, size = 0x4000, scoped, tag = 'input window, operand 3, single buffered']
    #allocation11 [shape = 'u8[16384]{0}', space=vmem, size = 0x4000, scoped, tag = 'input window, operand 5, single buffered']
    #allocation12 [shape = 's32[1]{0}', space=sflag, size = 0x4, scoped, tag = 'scoped memory for tpu_custom_call.1']
    #allocation13 [shape = 'u8[8192]{0}', space=vmem, size = 0x2000, scoped, tag = 'output window, operand 0']
    %12 = vsyncpa [#allocation6], 0
    %s13 = scalar_lea.sflag [#allocation6], 1
    %14 = vsyncpa %s13, 0
    %15 = vsyncpa [#allocation9], 0
    %16 = vsyncpa [#allocation12], 0
    %17 = vsyncpa [#allocation7], 0
    %s18 = scalar_lea.sflag [#allocation7], 1
    %19 = vsyncpa %s18, 0
    loop: start=0, step=1, limit=4
    $region2: #{tpu_custom_call.1} parent=1 // loop_pre_header
      _
    $region3: #{tpu_custom_call.1} parent=1 // loop_header
      %s21 = sphi 0, %s25
      %p22 = scmp.ge.s32.totalorder %s21, 4
      %s28 = sphi 0, %s47
      %s29 = sphi 0, %s43
      %s30 = sphi 0, %s39
      %s31 = sphi 0, %s28
      %s32 = sphi 0, %s29
      %s33 = sphi 0, %s30
      %s34 = sphi 0, %s31
      %s35 = sphi 0, %s32
      %s36 = sphi 0, %s33
      %s50 = sphi 0, %s52
      %s53 = sphi 0, %s50
      %s54 = sphi 0, %s53
      %s70 = sphi 0, %s54
      %s74 = sphi 0, %s74
      %s76 = sphi 0, %s74
      %s77 = sphi 0, %s76
      %s91 = sphi 0, %s77
      %s95 = sphi 0, %s95
      %s97 = sphi 0, %s95
      %s98 = sphi 0, %s97
      %s112 = sphi 0, %s98
      %s116 = sphi 0, %s116
      %s118 = sphi 0, %s116
      %s119 = sphi 0, %s118
      %s133 = sphi 0, %s119
      %s137 = sphi 0, %s137
      %s139 = sphi 0, %s137
      %s140 = sphi 0, %s139
      %s154 = sphi 0, %s140
      %s158 = sphi 0, %s158
      %s160 = sphi 0, %s158
      %s161 = sphi 0, %s160
      %s175 = sphi 0, %s161
      %s179 = sphi 0, %s179
      %s181 = sphi 0, %s179
      %s182 = sphi 0, %s181
      %s196 = sphi 0, %s182
      %s204 = sphi 0, %s206
      %s207 = sphi 0, %s204
      %s208 = sphi 0, %s207
      %s224 = sphi 0, %s208
    $region4: #{tpu_custom_call.1} parent=1 // loop_header_branch
      %24 = sbr.rel (%p22) target = $region8
    $region5: #{tpu_custom_call.1} parent=1 // loop_body
      %s26 = ssub.s32 %s21, 1
      %s27 = ssub.s32 %s21, 2
      %s37 = sadd.s32 1, %s30
      %p38 = scmp.ge.s32.totalorder %s37, 1
      %s39 = scalar_select %p38, 0, %s37
      %s40 = sadd.s32 1, %s29
      %s41 = scalar_select %p38, %s40, %s29
      %p42 = scmp.ge.s32.totalorder %s41, 1
      %s43 = scalar_select %p42, 0, %s41
      %s44 = sadd.s32 1, %s28
      %s45 = scalar_select %p42, %s44, %s28
      %p46 = scmp.ge.s32.totalorder %s45, 2
      %s47 = scalar_select %p46, 0, %s45
      %s48 = ssub.s32 %s28, %s47
      %p49 = scmp.eq.s32.totalorder %s48, 0
      %s51 = sadd.s32 %s50, 1
      %s52 = scalar_select %p49, %s50, %s51
      %p55 = pneg %p49
      %p56 = scmp.eq.s32.totalorder %s21, 1
      %p57 = por %p55, %p56
      %p58 = scmp.ne.s32.totalorder %s50, %s53
      %p59 = scmp.eq.s32.totalorder %s21, 0
      %p60 = por %p58, %p59
      %p61 = scmp.ne.s32.totalorder %s50, %s53
      %p62 = scmp.eq.s32.totalorder %s26, 1
      %p63 = por %p61, %p62
      %p64 = scmp.ne.s32.totalorder %s53, %s54
      %p65 = scmp.eq.s32.totalorder %s26, 0
      %p66 = por %p64, %p65
      %p67 = scmp.ne.s32.totalorder %s53, %s54
      %p68 = scmp.eq.s32.totalorder %s27, 1
      %p69 = por %p67, %p68
      %p71 = scmp.ne.s32.totalorder %s54, %s70
      %p72 = scmp.eq.s32.totalorder %s27, 0
      %p73 = por %p71, %p72
      %s75 = sadd.s32 %s74, 1
      %p78 = scmp.eq.s32.totalorder %s21, 1
      %p79 = scmp.ne.s32.totalorder %s74, %s76
      %p80 = scmp.eq.s32.totalorder %s21, 0
      %p81 = por %p79, %p80
      %p82 = scmp.ne.s32.totalorder %s74, %s76
      %p83 = scmp.eq.s32.totalorder %s26, 1
      %p84 = por %p82, %p83
      %p85 = scmp.ne.s32.totalorder %s76, %s77
      %p86 = scmp.eq.s32.totalorder %s26, 0
      %p87 = por %p85, %p86
      %p88 = scmp.ne.s32.totalorder %s76, %s77
      %p89 = scmp.eq.s32.totalorder %s27, 1
      %p90 = por %p88, %p89
      %p92 = scmp.ne.s32.totalorder %s77, %s91
      %p93 = scmp.eq.s32.totalorder %s27, 0
      %p94 = por %p92, %p93
      %s96 = sadd.s32 %s95, 1
      %p99 = scmp.eq.s32.totalorder %s21, 1
      %p100 = scmp.ne.s32.totalorder %s95, %s97
      %p101 = scmp.eq.s32.totalorder %s21, 0
      %p102 = por %p100, %p101
      %p103 = scmp.ne.s32.totalorder %s95, %s97
      %p104 = scmp.eq.s32.totalorder %s26, 1
      %p105 = por %p103, %p104
      %p106 = scmp.ne.s32.totalorder %s97, %s98
      %p107 = scmp.eq.s32.totalorder %s26, 0
      %p108 = por %p106, %p107
      %p109 = scmp.ne.s32.totalorder %s97, %s98
      %p110 = scmp.eq.s32.totalorder %s27, 1
      %p111 = por %p109, %p110
      %p113 = scmp.ne.s32.totalorder %s98, %s112
      %p114 = scmp.eq.s32.totalorder %s27, 0
      %p115 = por %p113, %p114
      %s117 = sadd.s32 %s116, 1
      %p120 = scmp.eq.s32.totalorder %s21, 1
      %p121 = scmp.ne.s32.totalorder %s116, %s118
      %p122 = scmp.eq.s32.totalorder %s21, 0
      %p123 = por %p121, %p122
      %p124 = scmp.ne.s32.totalorder %s116, %s118
      %p125 = scmp.eq.s32.totalorder %s26, 1
      %p126 = por %p124, %p125
      %p127 = scmp.ne.s32.totalorder %s118, %s119
      %p128 = scmp.eq.s32.totalorder %s26, 0
      %p129 = por %p127, %p128
      %p130 = scmp.ne.s32.totalorder %s118, %s119
      %p131 = scmp.eq.s32.totalorder %s27, 1
      %p132 = por %p130, %p131
      %p134 = scmp.ne.s32.totalorder %s119, %s133
      %p135 = scmp.eq.s32.totalorder %s27, 0
      %p136 = por %p134, %p135
      %s138 = sadd.s32 %s137, 1
      %p141 = scmp.eq.s32.totalorder %s21, 1
      %p142 = scmp.ne.s32.totalorder %s137, %s139
      %p143 = scmp.eq.s32.totalorder %s21, 0
      %p144 = por %p142, %p143
      %p145 = scmp.ne.s32.totalorder %s137, %s139
      %p146 = scmp.eq.s32.totalorder %s26, 1
      %p147 = por %p145, %p146
      %p148 = scmp.ne.s32.totalorder %s139, %s140
      %p149 = scmp.eq.s32.totalorder %s26, 0
      %p150 = por %p148, %p149
      %p151 = scmp.ne.s32.totalorder %s139, %s140
      %p152 = scmp.eq.s32.totalorder %s27, 1
      %p153 = por %p151, %p152
      %p155 = scmp.ne.s32.totalorder %s140, %s154
      %p156 = scmp.eq.s32.totalorder %s27, 0
      %p157 = por %p155, %p156
      %s159 = sadd.s32 %s158, 1
      %p162 = scmp.eq.s32.totalorder %s21, 1
      %p163 = scmp.ne.s32.totalorder %s158, %s160
      %p164 = scmp.eq.s32.totalorder %s21, 0
      %p165 = por %p163, %p164
      %p166 = scmp.ne.s32.totalorder %s158, %s160
      %p167 = scmp.eq.s32.totalorder %s26, 1
      %p168 = por %p166, %p167
      %p169 = scmp.ne.s32.totalorder %s160, %s161
      %p170 = scmp.eq.s32.totalorder %s26, 0
      %p171 = por %p169, %p170
      %p172 = scmp.ne.s32.totalorder %s160, %s161
      %p173 = scmp.eq.s32.totalorder %s27, 1
      %p174 = por %p172, %p173
      %p176 = scmp.ne.s32.totalorder %s161, %s175
      %p177 = scmp.eq.s32.totalorder %s27, 0
      %p178 = por %p176, %p177
      %s180 = sadd.s32 %s179, 1
      %p183 = scmp.eq.s32.totalorder %s21, 1
      %p184 = scmp.ne.s32.totalorder %s179, %s181
      %p185 = scmp.eq.s32.totalorder %s21, 0
      %p186 = por %p184, %p185
      %p187 = scmp.ne.s32.totalorder %s179, %s181
      %p188 = scmp.eq.s32.totalorder %s26, 1
      %p189 = por %p187, %p188
      %p190 = scmp.ne.s32.totalorder %s181, %s182
      %p191 = scmp.eq.s32.totalorder %s26, 0
      %p192 = por %p190, %p191
      %p193 = scmp.ne.s32.totalorder %s181, %s182
      %p194 = scmp.eq.s32.totalorder %s27, 1
      %p195 = por %p193, %p194
      %p197 = scmp.ne.s32.totalorder %s182, %s196
      %p198 = scmp.eq.s32.totalorder %s27, 0
      %p199 = por %p197, %p198
      %s200 = ssub.s32 %s28, %s47
      %s201 = ssub.s32 %s29, %s43
      %s202 = sor.u32 %s200, %s201
      %p203 = scmp.eq.s32.totalorder %s202, 0
      %s205 = sadd.s32 %s204, 1
      %s206 = scalar_select %p203, %s204, %s205
      %p209 = pneg %p203
      %p210 = scmp.eq.s32.totalorder %s21, 1
      %p211 = por %p209, %p210
      %p212 = scmp.ne.s32.totalorder %s204, %s207
      %p213 = scmp.eq.s32.totalorder %s21, 0
      %p214 = por %p212, %p213
      %p215 = scmp.ne.s32.totalorder %s204, %s207
      %p216 = scmp.eq.s32.totalorder %s26, 1
      %p217 = por %p215, %p216
      %p218 = scmp.ne.s32.totalorder %s207, %s208
      %p219 = scmp.eq.s32.totalorder %s26, 0
      %p220 = por %p218, %p219
      %p221 = scmp.ne.s32.totalorder %s207, %s208
      %p222 = scmp.eq.s32.totalorder %s27, 1
      %p223 = por %p221, %p222
      %p225 = scmp.ne.s32.totalorder %s208, %s224
      %p226 = scmp.eq.s32.totalorder %s27, 0
      %p227 = por %p225, %p226
      %p228 = scmp.le.s32.totalorder 1, %s21
      %p229 = scmp.lt.s32.totalorder %s21, 3
      %p230 = pnand %p228, %p229
      %p231 = pneg %p230
      // Predicated region
      $region9: #{tpu_custom_call.1} parent=5 // pred_check
        _
      $region10: #{tpu_custom_call.1} parent=5 // pred_check_branch
        %233 = sbr.rel (%p230) target = $region12
      $region11: #{tpu_custom_call.1} parent=5 // pred_region
        %s234 = ssub.s32 %s21, 1
        // Predicated region
        $region13: #{tpu_custom_call.1} parent=11 // pred_check
          %p235 = pneg %p87
        $region14: #{tpu_custom_call.1} parent=11 // pred_check_branch
          %237 = sbr.rel (%p235) target = $region16
        $region15: #{tpu_custom_call.1} parent=11 // pred_region
          %239 = vsyncadd [#allocation9], 0
          %s240 = sshll.u32 %s1, 4
          %s241 = int_to_ptr.hbm [resolvable:$true] %s240
          %s242 = sshll.u32 [#allocation8], 4
          %s243 = int_to_ptr.vmem [resolvable:$true] %s242
          %248 = dma.hbm_to_vmem [thread:$0]  %s241, 512, %s243, [#allocation9], 128, 128, 8
        $region16: #{tpu_custom_call.1} parent=11 // pred_fallthru
          _
        // Predicated region
        $region17: #{tpu_custom_call.1} parent=11 // pred_check
          %p249 = pneg %p108
        $region18: #{tpu_custom_call.1} parent=11 // pred_check_branch
          %251 = sbr.rel (%p249) target = $region20
        $region19: #{tpu_custom_call.1} parent=11 // pred_region
          _
        $region20: #{tpu_custom_call.1} parent=11 // pred_fallthru
          _
        // Predicated region
        $region21: #{tpu_custom_call.1} parent=11 // pred_check
          %p252 = pneg %p129
        $region22: #{tpu_custom_call.1} parent=11 // pred_check_branch
          %254 = sbr.rel (%p252) target = $region24
        $region23: #{tpu_custom_call.1} parent=11 // pred_region
          %256 = vsyncadd [#allocation9], 0
          %s257 = sshll.u32 %s3, 4
          %s258 = int_to_ptr.hbm [resolvable:$true] %s257
          %s259 = sshll.u32 [#allocation10], 4
          %s260 = int_to_ptr.vmem [resolvable:$true] %s259
          %265 = dma.hbm_to_vmem [thread:$0]  %s258, 512, %s260, [#allocation9], 128, 128, 8
        $region24: #{tpu_custom_call.1} parent=11 // pred_fallthru
          _
        // Predicated region
        $region25: #{tpu_custom_call.1} parent=11 // pred_check
          %p266 = pneg %p150
        $region26: #{tpu_custom_call.1} parent=11 // pred_check_branch
          %268 = sbr.rel (%p266) target = $region28
        $region27: #{tpu_custom_call.1} parent=11 // pred_region
          _
        $region28: #{tpu_custom_call.1} parent=11 // pred_fallthru
          _
        // Predicated region
        $region29: #{tpu_custom_call.1} parent=11 // pred_check
          %p269 = pneg %p171
        $region30: #{tpu_custom_call.1} parent=11 // pred_check_branch
          %271 = sbr.rel (%p269) target = $region32
        $region31: #{tpu_custom_call.1} parent=11 // pred_region
          %273 = vsyncadd [#allocation12], 0
          %s274 = sshll.u32 %s5, 4
          %s275 = int_to_ptr.hbm [resolvable:$true] %s274
          %s276 = sshll.u32 [#allocation11], 4
          %s277 = int_to_ptr.vmem [resolvable:$true] %s276
          %282 = dma.hbm_to_vmem [thread:$0]  %s275, 512, %s277, [#allocation12], 128, 128, 8
        $region32: #{tpu_custom_call.1} parent=11 // pred_fallthru
          _
        // Predicated region
        $region33: #{tpu_custom_call.1} parent=11 // pred_check
          %p283 = pneg %p192
        $region34: #{tpu_custom_call.1} parent=11 // pred_check_branch
          %285 = sbr.rel (%p283) target = $region36
        $region35: #{tpu_custom_call.1} parent=11 // pred_region
          _
        $region36: #{tpu_custom_call.1} parent=11 // pred_fallthru
          _
      $region12: #{tpu_custom_call.1} parent=5 // pred_fallthru
        _
      %p286 = scmp.lt.s32.totalorder %s21, 2
      // Predicated region
      $region37: #{tpu_custom_call.1} parent=5 // pred_check
        %p287 = pneg %p286
      $region38: #{tpu_custom_call.1} parent=5 // pred_check_branch
        %289 = sbr.rel (%p287) target = $region40
      $region39: #{tpu_custom_call.1} parent=5 // pred_region
        // Predicated region
        $region41: #{tpu_custom_call.1} parent=39 // pred_check
          %p290 = pneg %p60
        $region42: #{tpu_custom_call.1} parent=39 // pred_check_branch
          %292 = sbr.rel (%p290) target = $region44
        $region43: #{tpu_custom_call.1} parent=39 // pred_region
          %s293 = sand.u32 %s50, 1
          %s294 = scalar_lea.sflag [#allocation6], %s293
          %s295 = sand.u32 %s50, 1
          %s296 = smul.addr %s295, 8
          %s297 = scalar_lea.vmem [#allocation5], %s296
          %299 = vsyncadd %s294, 0
          %s300 = smul.addr %s28, 8
          %s301 = scalar_lea.hbm %s0, %s300
          %s303 = sshll.u32 %s301, 4
          %s304 = int_to_ptr.hbm [resolvable:$true] %s303
          %s305 = sshll.u32 %s297, 4
          %s306 = int_to_ptr.vmem [resolvable:$true] %s305
          %308 = dma.hbm_to_vmem [thread:$0]  %s304, 128, %s306, %s294
        $region44: #{tpu_custom_call.1} parent=39 // pred_fallthru
          _
      $region40: #{tpu_custom_call.1} parent=5 // pred_fallthru
        _
      %p309 = scmp.le.s32.totalorder 1, %s21
      %p310 = scmp.lt.s32.totalorder %s21, 3
      %p311 = pnand %p309, %p310
      %p312 = pneg %p311
      // Predicated region
      $region45: #{tpu_custom_call.1} parent=5 // pred_check
        _
      $region46: #{tpu_custom_call.1} parent=5 // pred_check_branch
        %314 = sbr.rel (%p311) target = $region48
      $region47: #{tpu_custom_call.1} parent=5 // pred_region
        %s315 = ssub.s32 %s21, 1
        %s316 = sand.u32 %s53, 1
        %s317 = scalar_lea.sflag [#allocation6], %s316
        %s318 = sand.u32 %s53, 1
        %s319 = smul.addr %s318, 8
        %s320 = scalar_lea.vmem [#allocation5], %s319
        // Predicated region
        $region49: #{tpu_custom_call.1} parent=47 // pred_check
          %p321 = pneg %p66
        $region50: #{tpu_custom_call.1} parent=47 // pred_check_branch
          %323 = sbr.rel (%p321) target = $region52
        $region51: #{tpu_custom_call.1} parent=47 // pred_region
          %325 = dma.done %s317, 128
        $region52: #{tpu_custom_call.1} parent=47 // pred_fallthru
          _
        // Predicated region
        $region53: #{tpu_custom_call.1} parent=47 // pred_check
          %p326 = pneg %p87
        $region54: #{tpu_custom_call.1} parent=47 // pred_check_branch
          %328 = sbr.rel (%p326) target = $region56
        $region55: #{tpu_custom_call.1} parent=47 // pred_region
          %330 = dma.done [#allocation9], 512
        $region56: #{tpu_custom_call.1} parent=47 // pred_fallthru
          _
        // Predicated region
        $region57: #{tpu_custom_call.1} parent=47 // pred_check
          %p331 = pneg %p129
        $region58: #{tpu_custom_call.1} parent=47 // pred_check_branch
          %333 = sbr.rel (%p331) target = $region60
        $region59: #{tpu_custom_call.1} parent=47 // pred_region
          %335 = dma.done [#allocation9], 512
        $region60: #{tpu_custom_call.1} parent=47 // pred_fallthru
          _
        // Predicated region
        $region61: #{tpu_custom_call.1} parent=47 // pred_check
          %p336 = pneg %p171
        $region62: #{tpu_custom_call.1} parent=47 // pred_check_branch
          %338 = sbr.rel (%p336) target = $region64
        $region63: #{tpu_custom_call.1} parent=47 // pred_region
          %340 = dma.done [#allocation12], 512
        $region64: #{tpu_custom_call.1} parent=47 // pred_fallthru
          _
        %s341 = sand.u32 %s53, 1
        %s342 = scalar_lea.sflag [#allocation6], %s341
        %s343 = sand.u32 %s53, 1
        %s344 = smul.addr %s343, 8
        %s345 = scalar_lea.vmem [#allocation5], %s344
        %p346 = pneg %p66
        %p347 = pneg %p63
        %p348 = pneg %p87
        %p349 = pneg %p84
        %p350 = pneg %p108
        %p351 = pneg %p105
        %p352 = pneg %p129
        %p353 = pneg %p126
        %p354 = pneg %p150
        %p355 = pneg %p147
        %p356 = pneg %p171
        %p357 = pneg %p168
        %p358 = pneg %p192
        %p359 = pneg %p189
        %p360 = pneg %p220
        %p361 = pneg %p217
        %s362 = sand.u32 %s207, 1
        %s363 = scalar_lea.sflag [#allocation7], %s362
        %s364 = sand.u32 %s207, 1
        %s365 = smul.addr %s364, 8
        %s366 = scalar_lea.vmem [#allocation13], %s365
        %p367 = scmp.eq.s32.totalorder %s33, 0
        // Predicated region
        $region65: #{tpu_custom_call.1} parent=47 // pred_check
          %p368 = pneg %p367
        $region66: #{tpu_custom_call.1} parent=47 // pred_check_branch
          %370 = sbr.rel (%p368) target = $region68
        $region67: #{tpu_custom_call.1} parent=47 // pred_region
          %vm371 = vcmask 261120
          %372 = vst.msk [vmem:[#allocation2] sm:$0xff] %vm371, 0.0
        $region68: #{tpu_custom_call.1} parent=47 // pred_fallthru
          _
        %p373 = scmp.eq.s32.totalorder %s32, 0
        // Predicated region
        $region69: #{tpu_custom_call.1} parent=47 // pred_check
          %p374 = pneg %p373
        $region70: #{tpu_custom_call.1} parent=47 // pred_check_branch
          %376 = sbr.rel (%p374) target = $region72
        $region71: #{tpu_custom_call.1} parent=47 // pred_region
          %v377 = vld [vmem:[%s320] sm:$0xff]
          %s378 = smul.u32 %s33, 32
          %s379 = scalar_lea.vmem [#allocation10], %s378
          %v380 = vld [vmem:[%s379] sm:$0xff]
          %v381 = vld [vmem:[%s379 + $0x8] sm:$0xff]
          %v382 = vld [vmem:[%s379 + $0x10] sm:$0xff]
          %v383 = vld [vmem:[%s379 + $0x18] sm:$0xff]
          %s384 = scalar_lea.vmem %s4, %s33
          %v385 = vld [vmem:[%s384] sm:$0x1]
          %v387 = vperm.slane %v385, 0
          %vm389 = vcmask 261120
          %v391 = vsel %vm389, %v377, 0
          %393 = vmatpush.msra.mxu0 0.0
          %394 = vmatpush.msra.mxu0 0.0
          %395 = vmatpush.msra.mxu0 0.0
          %396 = vmatpush.msra.mxu0 0.0
          %397 = vmatpush.msra.mxu0 0.0
          %398 = vmatpush.msra.mxu0 0.0
          %399 = vmatpush.msra.mxu0 0.0
          %400 = vmatpush.msra.mxu0 0.0
          %401 = vmatpush.msra.mxu0 0.0
          %402 = vmatpush.msra.mxu0 0.0
          %403 = vmatpush.msra.mxu0 0.0
          %404 = vmatpush.msra.mxu0 0.0
          %405 = vmatpush.msra.mxu0 %v383
          %406 = vmatpush.msra.mxu0 %v382
          %407 = vmatpush.msra.mxu0 %v381
          %408 = vmatpush.msra.mxu0 %v380
          %409 = vmatmul.f32.gmra.mxu0 %v391
          %v410 = vpop.f32.mrf.mxu0
          %v411 = vadd.f32 %v387, %v410
          %412 = vdwg.mxu0
          %s413 = smul.u32 %s33, 8
          %s414 = scalar_lea.vmem [#allocation3], %s413
          %415 = vst.msk [vmem:[%s414] sm:$0xff] %vm389, %v411
          %417 = vrot.lane.b32.xlu0 %v411, 96
          %v418 = vpop.permute.xlu0 %417
          %s420 = scalar_lea.vmem [#allocation4], %s413
          %421 = vst.msk [vmem:[%s420] sm:$0xff] %vm389, %v418
        $region72: #{tpu_custom_call.1} parent=47 // pred_fallthru
          _
        %s422 = smul.u32 %s33, 8
        %s423 = scalar_lea.vmem [#allocation3], %s422
        %v424 = vld [vmem:[%s423] sm:$0xff]
        %s425 = scalar_lea.vmem [#allocation4], %s422
        %v426 = vld [vmem:[%s425] sm:$0xff]
        %s427 = smul.u32 %s32, 8
        %s428 = scalar_lea.vmem %s320, %s427 [#allocation5]
        %v429 = vld [vmem:[%s428] sm:$0xff]
        %s430 = smul.u32 %s33, 32
        %s431 = scalar_lea.vmem [#allocation8], %s430
        %v432 = vld [vmem:[%s431] sm:$0xff]
        %v433 = vld [vmem:[%s431 + $0x8] sm:$0xff]
        %v434 = vld [vmem:[%s431 + $0x10] sm:$0xff]
        %v435 = vld [vmem:[%s431 + $0x18] sm:$0xff]
        %s436 = scalar_lea.vmem %s2, %s33
        %v437 = vld [vmem:[%s436] sm:$0x1]
        %v439 = vperm.slane %v437, 0
        %vm441 = vcmask 261120
        %v443 = vsel %vm441, %v429, 0
        %445 = vmatpush.msra.mxu0 0.0
        %446 = vmatpush.msra.mxu0 0.0
        %447 = vmatpush.msra.mxu0 0.0
        %448 = vmatpush.msra.mxu0 0.0
        %449 = vmatpush.msra.mxu0 0.0
        %450 = vmatpush.msra.mxu0 0.0
        %451 = vmatpush.msra.mxu0 0.0
        %452 = vmatpush.msra.mxu0 0.0
        %453 = vmatpush.msra.mxu0 0.0
        %454 = vmatpush.msra.mxu0 0.0
        %455 = vmatpush.msra.mxu0 0.0
        %456 = vmatpush.msra.mxu0 0.0
        %457 = vmatpush.msra.mxu0 %v435
        %458 = vmatpush.msra.mxu0 %v434
        %459 = vmatpush.msra.mxu0 %v433
        %460 = vmatpush.msra.mxu0 %v432
        %461 = vmatmul.f32.gmra.mxu0 %v443
        %v462 = vpop.f32.mrf.mxu0
        %v463 = vadd.f32 %v439, %v462
        %464 = vdwg.mxu0
        %vm465 = vcmask 64512
        %v467 = vsel %vm465, %v463, 0
        %v470 = vsel %vm465, %v424, 0
        %472 = vmatpush.xpose.msra.mxu0 0.0
        %473 = vmatpush.xpose.msra.mxu0 0.0
        %474 = vmatpush.xpose.msra.mxu0 0.0
        %475 = vmatpush.xpose.msra.mxu0 0.0
        %476 = vmatpush.xpose.msra.mxu0 0.0
        %477 = vmatpush.xpose.msra.mxu0 0.0
        %478 = vmatpush.xpose.msra.mxu0 0.0
        %479 = vmatpush.xpose.msra.mxu0 0.0
        %480 = vmatpush.xpose.msra.mxu0 0.0
        %481 = vmatpush.xpose.msra.mxu0 0.0
        %482 = vmatpush.xpose.msra.mxu0 0.0
        %483 = vmatpush.xpose.msra.mxu0 0.0
        %484 = vmatpush.xpose.msra.mxu0 0.0
        %485 = vmatpush.xpose.msra.mxu0 0.0
        %486 = vmatpush.xpose.msra.mxu0 0.0
        %487 = vmatpush.xpose.msra.mxu0 %v470
        %488 = vmatmul.f32.gmra.mxu0 %v467
        %v489 = vpop.f32.mrf.mxu0
        %v490 = vadd.f32 0.0, %v489
        %491 = vdwg.mxu0
        %v492 = vsel %vm465, %v490, -inf
        %493 = vmax.xlane.f32.xlu0 %v492
        %v494 = vpop.xlane.xlu0 %493
        %v495 = vsub.f32 %v490, %v494
        %v496 = vmul.f32 %v495, 1.442695
        %v497 = vpow.pop %v496
        %v498 = vsel %vm465, %v497, 0.0
        %499 = vadd.xlane.f32.xlu0 %v498
        %v500 = vpop.xlane.xlu0 %499
        %v502 = vsel %vm465, %v497, 0
        %504 = vmatpush.msra.mxu0 0.0
        %505 = vmatpush.msra.mxu0 0.0
        %506 = vmatpush.msra.mxu0 0.0
        %507 = vmatpush.msra.mxu0 0.0
        %508 = vmatpush.msra.mxu0 0.0
        %509 = vmatpush.msra.mxu0 0.0
        %510 = vmatpush.msra.mxu0 0.0
        %511 = vmatpush.msra.mxu0 0.0
        %512 = vmatpush.msra.mxu0 0.0
        %513 = vmatpush.msra.mxu0 0.0
        %514 = vmatpush.msra.mxu0 0.0
        %515 = vmatpush.msra.mxu0 0.0
        %516 = vmatpush.msra.mxu0 0.0
        %517 = vmatpush.msra.mxu0 0.0
        %518 = vmatpush.msra.mxu0 0.0
        %519 = vmatpush.msra.mxu0 %v426
        %520 = vmatmul.f32.gmra.mxu0 %v502
        %v521 = vpop.f32.mrf.mxu0
        %v522 = vadd.f32 0.0, %v521
        %523 = vdwg.mxu0
        %v524 = vrcp.pop %v500
        %v525 = vmul.f32 %v522, %v524
        %526 = vrot.lane.b32.xlu0 %v463, 120
        %v527 = vpop.permute.xlu0 %526
        %528 = vrot.lane.b32.xlu0 %v424, 120
        %v529 = vpop.permute.xlu0 %528
        %v530 = vsel %vm465, %v527, 0
        %v532 = vsel %vm465, %v529, 0
        %534 = vmatpush.xpose.msra.mxu0 0.0
        %535 = vmatpush.xpose.msra.mxu0 0.0
        %536 = vmatpush.xpose.msra.mxu0 0.0
        %537 = vmatpush.xpose.msra.mxu0 0.0
        %538 = vmatpush.xpose.msra.mxu0 0.0
        %539 = vmatpush.xpose.msra.mxu0 0.0
        %540 = vmatpush.xpose.msra.mxu0 0.0
        %541 = vmatpush.xpose.msra.mxu0 0.0
        %542 = vmatpush.xpose.msra.mxu0 0.0
        %543 = vmatpush.xpose.msra.mxu0 0.0
        %544 = vmatpush.xpose.msra.mxu0 0.0
        %545 = vmatpush.xpose.msra.mxu0 0.0
        %546 = vmatpush.xpose.msra.mxu0 0.0
        %547 = vmatpush.xpose.msra.mxu0 0.0
        %548 = vmatpush.xpose.msra.mxu0 0.0
        %549 = vmatpush.xpose.msra.mxu0 %v532
        %550 = vmatmul.f32.gmra.mxu0 %v530
        %v551 = vpop.f32.mrf.mxu0
        %v552 = vadd.f32 0.0, %v551
        %553 = vdwg.mxu0
        %v554 = vsel %vm465, %v552, -inf
        %555 = vmax.xlane.f32.xlu0 %v554
        %v556 = vpop.xlane.xlu0 %555
        %v557 = vsub.f32 %v552, %v556
        %v558 = vmul.f32 %v557, 1.442695
        %v559 = vpow.pop %v558
        %v560 = vsel %vm465, %v559, 0.0
        %561 = vadd.xlane.f32.xlu0 %v560
        %v562 = vpop.xlane.xlu0 %561
        %564 = vrot.lane.b32.xlu0 %v426, 120
        %v565 = vpop.permute.xlu0 %564
        %v568 = vsel %vm465, %v559, 0
        %570 = vmatpush.msra.mxu0 0.0
        %571 = vmatpush.msra.mxu0 0.0
        %572 = vmatpush.msra.mxu0 0.0
        %573 = vmatpush.msra.mxu0 0.0
        %574 = vmatpush.msra.mxu0 0.0
        %575 = vmatpush.msra.mxu0 0.0
        %576 = vmatpush.msra.mxu0 0.0
        %577 = vmatpush.msra.mxu0 0.0
        %578 = vmatpush.msra.mxu0 0.0
        %579 = vmatpush.msra.mxu0 0.0
        %580 = vmatpush.msra.mxu0 0.0
        %581 = vmatpush.msra.mxu0 0.0
        %582 = vmatpush.msra.mxu0 0.0
        %583 = vmatpush.msra.mxu0 0.0
        %584 = vmatpush.msra.mxu0 0.0
        %585 = vmatpush.msra.mxu0 %v565
        %586 = vmatmul.f32.gmra.mxu0 %v568
        %v587 = vpop.f32.mrf.mxu0
        %v588 = vadd.f32 0.0, %v587
        %589 = vdwg.mxu0
        %v590 = vrcp.pop %v562
        %v591 = vmul.f32 %v588, %v590
        %592 = vrot.lane.b32.xlu0 %v463, 112
        %v593 = vpop.permute.xlu0 %592
        %594 = vrot.lane.b32.xlu0 %v424, 112
        %v595 = vpop.permute.xlu0 %594
        %v596 = vsel %vm465, %v593, 0
        %v598 = vsel %vm465, %v595, 0
        %600 = vmatpush.xpose.msra.mxu0 0.0
        %601 = vmatpush.xpose.msra.mxu0 0.0
        %602 = vmatpush.xpose.msra.mxu0 0.0
        %603 = vmatpush.xpose.msra.mxu0 0.0
        %604 = vmatpush.xpose.msra.mxu0 0.0
        %605 = vmatpush.xpose.msra.mxu0 0.0
        %606 = vmatpush.xpose.msra.mxu0 0.0
        %607 = vmatpush.xpose.msra.mxu0 0.0
        %608 = vmatpush.xpose.msra.mxu0 0.0
        %609 = vmatpush.xpose.msra.mxu0 0.0
        %610 = vmatpush.xpose.msra.mxu0 0.0
        %611 = vmatpush.xpose.msra.mxu0 0.0
        %612 = vmatpush.xpose.msra.mxu0 0.0
        %613 = vmatpush.xpose.msra.mxu0 0.0
        %614 = vmatpush.xpose.msra.mxu0 0.0
        %615 = vmatpush.xpose.msra.mxu0 %v598
        %616 = vmatmul.f32.gmra.mxu0 %v596
        %v617 = vpop.f32.mrf.mxu0
        %v618 = vadd.f32 0.0, %v617
        %619 = vdwg.mxu0
        %v620 = vsel %vm465, %v618, -inf
        %621 = vmax.xlane.f32.xlu0 %v620
        %v622 = vpop.xlane.xlu0 %621
        %v623 = vsub.f32 %v618, %v622
        %v624 = vmul.f32 %v623, 1.442695
        %v625 = vpow.pop %v624
        %v626 = vsel %vm465, %v625, 0.0
        %627 = vadd.xlane.f32.xlu0 %v626
        %v628 = vpop.xlane.xlu0 %627
        %629 = vrot.lane.b32.xlu0 %v426, 112
        %v630 = vpop.permute.xlu0 %629
        %v633 = vsel %vm465, %v625, 0
        %635 = vmatpush.msra.mxu0 0.0
        %636 = vmatpush.msra.mxu0 0.0
        %637 = vmatpush.msra.mxu0 0.0
        %638 = vmatpush.msra.mxu0 0.0
        %639 = vmatpush.msra.mxu0 0.0
        %640 = vmatpush.msra.mxu0 0.0
        %641 = vmatpush.msra.mxu0 0.0
        %642 = vmatpush.msra.mxu0 0.0
        %643 = vmatpush.msra.mxu0 0.0
        %644 = vmatpush.msra.mxu0 0.0
        %645 = vmatpush.msra.mxu0 0.0
        %646 = vmatpush.msra.mxu0 0.0
        %647 = vmatpush.msra.mxu0 0.0
        %648 = vmatpush.msra.mxu0 0.0
        %649 = vmatpush.msra.mxu0 0.0
        %650 = vmatpush.msra.mxu0 %v630
        %651 = vmatmul.f32.gmra.mxu0 %v633
        %v652 = vpop.f32.mrf.mxu0
        %v653 = vadd.f32 0.0, %v652
        %654 = vdwg.mxu0
        %v655 = vrcp.pop %v628
        %v656 = vmul.f32 %v653, %v655
        %657 = vrot.lane.b32.xlu0 %v463, 104
        %v658 = vpop.permute.xlu0 %657
        %659 = vrot.lane.b32.xlu0 %v424, 104
        %v660 = vpop.permute.xlu0 %659
        %v661 = vsel %vm465, %v658, 0
        %v663 = vsel %vm465, %v660, 0
        %665 = vmatpush.xpose.msra.mxu0 0.0
        %666 = vmatpush.xpose.msra.mxu0 0.0
        %667 = vmatpush.xpose.msra.mxu0 0.0
        %668 = vmatpush.xpose.msra.mxu0 0.0
        %669 = vmatpush.xpose.msra.mxu0 0.0
        %670 = vmatpush.xpose.msra.mxu0 0.0
        %671 = vmatpush.xpose.msra.mxu0 0.0
        %672 = vmatpush.xpose.msra.mxu0 0.0
        %673 = vmatpush.xpose.msra.mxu0 0.0
        %674 = vmatpush.xpose.msra.mxu0 0.0
        %675 = vmatpush.xpose.msra.mxu0 0.0
        %676 = vmatpush.xpose.msra.mxu0 0.0
        %677 = vmatpush.xpose.msra.mxu0 0.0
        %678 = vmatpush.xpose.msra.mxu0 0.0
        %679 = vmatpush.xpose.msra.mxu0 0.0
        %680 = vmatpush.xpose.msra.mxu0 %v663
        %681 = vmatmul.f32.gmra.mxu0 %v661
        %v682 = vpop.f32.mrf.mxu0
        %v683 = vadd.f32 0.0, %v682
        %684 = vdwg.mxu0
        %v685 = vsel %vm465, %v683, -inf
        %686 = vmax.xlane.f32.xlu0 %v685
        %v687 = vpop.xlane.xlu0 %686
        %v688 = vsub.f32 %v683, %v687
        %v689 = vmul.f32 %v688, 1.442695
        %v690 = vpow.pop %v689
        %v691 = vsel %vm465, %v690, 0.0
        %692 = vadd.xlane.f32.xlu0 %v691
        %v693 = vpop.xlane.xlu0 %692
        %694 = vrot.lane.b32.xlu0 %v426, 104
        %v695 = vpop.permute.xlu0 %694
        %v698 = vsel %vm465, %v690, 0
        %700 = vmatpush.msra.mxu0 0.0
        %701 = vmatpush.msra.mxu0 0.0
        %702 = vmatpush.msra.mxu0 0.0
        %703 = vmatpush.msra.mxu0 0.0
        %704 = vmatpush.msra.mxu0 0.0
        %705 = vmatpush.msra.mxu0 0.0
        %706 = vmatpush.msra.mxu0 0.0
        %707 = vmatpush.msra.mxu0 0.0
        %708 = vmatpush.msra.mxu0 0.0
        %709 = vmatpush.msra.mxu0 0.0
        %710 = vmatpush.msra.mxu0 0.0
        %711 = vmatpush.msra.mxu0 0.0
        %712 = vmatpush.msra.mxu0 0.0
        %713 = vmatpush.msra.mxu0 0.0
        %714 = vmatpush.msra.mxu0 0.0
        %715 = vmatpush.msra.mxu0 %v695
        %716 = vmatmul.f32.gmra.mxu0 %v698
        %v717 = vpop.f32.mrf.mxu0
        %v718 = vadd.f32 0.0, %v717
        %719 = vdwg.mxu0
        %v720 = vrcp.pop %v693
        %v721 = vmul.f32 %v718, %v720
        %723 = vrot.lane.b32.xlu0 %v591, 8
        %v724 = vpop.permute.xlu0 %723
        %727 = vrot.lane.b32.xlu0 %v656, 16
        %v728 = vpop.permute.xlu0 %727
        %731 = vrot.lane.b32.xlu0 %v721, 24
        %v732 = vpop.permute.xlu0 %731
        %v734 = vsel %vm465, %v525, %v724
        %vm735 = vcmask 130048
        %v736 = vsel %vm735, %v734, %v728
        %vm737 = vcmask 195584
        %v738 = vsel %vm737, %v736, %v732
        %v739 = vld [vmem:[#allocation2] sm:$0xff]
        %s740 = scalar_lea.vmem [#allocation11], %s430
        %v741 = vld [vmem:[%s740] sm:$0xff]
        %v742 = vld [vmem:[%s740 + $0x8] sm:$0xff]
        %v743 = vld [vmem:[%s740 + $0x10] sm:$0xff]
        %v744 = vld [vmem:[%s740 + $0x18] sm:$0xff]
        %v746 = vsel %vm441, %v738, 0
        %748 = vmatpush.msra.mxu0 0.0
        %749 = vmatpush.msra.mxu0 0.0
        %750 = vmatpush.msra.mxu0 0.0
        %751 = vmatpush.msra.mxu0 0.0
        %752 = vmatpush.msra.mxu0 0.0
        %753 = vmatpush.msra.mxu0 0.0
        %754 = vmatpush.msra.mxu0 0.0
        %755 = vmatpush.msra.mxu0 0.0
        %756 = vmatpush.msra.mxu0 0.0
        %757 = vmatpush.msra.mxu0 0.0
        %758 = vmatpush.msra.mxu0 0.0
        %759 = vmatpush.msra.mxu0 0.0
        %760 = vmatpush.msra.mxu0 %v744
        %761 = vmatpush.msra.mxu0 %v743
        %762 = vmatpush.msra.mxu0 %v742
        %763 = vmatpush.msra.mxu0 %v741
        %764 = vmatmul.f32.gmra.mxu0 %v746
        %v765 = vpop.f32.mrf.mxu0
        %v766 = vadd.f32 0.0, %v765
        %767 = vdwg.mxu0
        %v768 = vadd.f32 %v739, %v766
        %769 = vst.msk [vmem:[#allocation2] sm:$0xff] %vm441, %v768
        // Predicated region
        $region73: #{tpu_custom_call.1} parent=47 // pred_check
          %p770 = pneg %p367
        $region74: #{tpu_custom_call.1} parent=47 // pred_check_branch
          %772 = sbr.rel (%p770) target = $region76
        $region75: #{tpu_custom_call.1} parent=47 // pred_region
          %v773 = vld [vmem:[#allocation2] sm:$0xff]
          %v774 = vld [vmem:[%s6] sm:$0x1]
          %v776 = vperm.slane %v774, 0
          %v778 = vadd.f32 %v773, %v776
          %779 = vst.msk [vmem:[%s366] sm:$0xff] %vm441, %v778
        $region76: #{tpu_custom_call.1} parent=47 // pred_fallthru
          _
        %s780 = sand.u32 %s207, 1
        %s781 = scalar_lea.sflag [#allocation7], %s780
        %s782 = sand.u32 %s207, 1
        %s783 = smul.addr %s782, 8
        %s784 = scalar_lea.vmem [#allocation13], %s783
        // Predicated region
        $region77: #{tpu_custom_call.1} parent=47 // pred_check
          %p785 = pneg %p217
        $region78: #{tpu_custom_call.1} parent=47 // pred_check_branch
          %787 = sbr.rel (%p785) target = $region80
        $region79: #{tpu_custom_call.1} parent=47 // pred_region
          %789 = vsyncadd %s781, 0
          %s790 = sadd.s32 %s32, %s31
          %s791 = smul.addr %s790, 8
          %s792 = scalar_lea.hbm %s7, %s791
          %s794 = sshll.u32 %s784, 4
          %s795 = int_to_ptr.vmem [resolvable:$true] %s794
          %s796 = sshll.u32 %s792, 4
          %s797 = int_to_ptr.hbm [resolvable:$true] %s796
          %799 = dma.vmem_to_hbm [thread:$0]  %s795, 128, %s797, %s781
        $region80: #{tpu_custom_call.1} parent=47 // pred_fallthru
          _
      $region48: #{tpu_custom_call.1} parent=5 // pred_fallthru
        _
      %p800 = scmp.le.s32.totalorder 2, %s21
      // Predicated region
      $region81: #{tpu_custom_call.1} parent=5 // pred_check
        %p801 = pneg %p800
      $region82: #{tpu_custom_call.1} parent=5 // pred_check_branch
        %803 = sbr.rel (%p801) target = $region84
      $region83: #{tpu_custom_call.1} parent=5 // pred_region
        %s804 = ssub.s32 %s21, 2
        // Predicated region
        $region85: #{tpu_custom_call.1} parent=83 // pred_check
          %p805 = pneg %p223
        $region86: #{tpu_custom_call.1} parent=83 // pred_check_branch
          %807 = sbr.rel (%p805) target = $region88
        $region87: #{tpu_custom_call.1} parent=83 // pred_region
          %s808 = sand.u32 %s208, 1
          %s809 = scalar_lea.sflag [#allocation7], %s808
          %s810 = sand.u32 %s208, 1
          %s811 = smul.addr %s810, 8
          %s812 = scalar_lea.vmem [#allocation13], %s811
          %814 = dma.done %s809, 128
        $region88: #{tpu_custom_call.1} parent=83 // pred_fallthru
          _
      $region84: #{tpu_custom_call.1} parent=5 // pred_fallthru
        _
    $region6: #{tpu_custom_call.1} parent=1 // loop_footer
      %s25 = sadd.s32 1, %s21
    $region7: #{tpu_custom_call.1} parent=1 // loop_footer_branch
      %20 = sbr.rel target = $region3
    $region8: #{tpu_custom_call.1} parent=1 // loop_exit
      _
    %815 = vsyncpa [#allocation6], 1
    %s816 = scalar_lea.sflag [#allocation6], 1
    %817 = vsyncpa %s816, 1
    %818 = vsyncpa [#allocation9], 1
    %819 = vsyncpa [#allocation12], 1
    %820 = vsyncpa [#allocation7], 1
    %s821 = scalar_lea.sflag [#allocation7], 1
    %822 = vsyncpa %s821, 1

</llo_original>
